<compile_context>
chip_gen: v7x
topology: tpu7x:2x2x1
jax: 0.10.0
libtpu: 0.0.40
codegen_flags: <defaults>
</compile_context>

<pallas_src>
import jax
import jax.numpy as jnp
from jax.experimental import pallas as pl
from jax.experimental.pallas import tpu as pltpu


def mlp_kernel(x_ref, w0_ref, b0_ref, w1_ref, b1_ref, w2_ref, b2_ref, o_ref):
    # fc0 + ReLU  (bf16 operands, f32 MXU accumulation; cast happens in VMEM)
    x = x_ref[...].astype(jnp.bfloat16)
    h1 = jnp.dot(x, w0_ref[...].astype(jnp.bfloat16),
                 preferred_element_type=jnp.float32)
    h1 = jnp.maximum(h1 + b0_ref[...], 0.0).astype(jnp.bfloat16)
    # fc1 + ReLU
    h2 = jnp.dot(h1, w1_ref[...].astype(jnp.bfloat16),
                 preferred_element_type=jnp.float32)
    h2 = jnp.maximum(h2 + b1_ref[...], 0.0).astype(jnp.bfloat16)
    # fc2 (logits)
    h3 = jnp.dot(h2, w2_ref[...].astype(jnp.bfloat16),
                 preferred_element_type=jnp.float32)
    o_ref[...] = (h3 + b2_ref[...]).astype(o_ref.dtype)


def _pad_to(a, shape):
    pads = [(0, t - s) for s, t in zip(a.shape, shape)]
    return jnp.pad(a, pads) if any(p[1] for p in pads) else a


def mlp_forward(x, w0, b0, w1, b1, w2, b2, *, max_tb=1024):
    """x: (B, 784) f32; weights stored as (in_features, out_features); biases (1, out)."""
    B, IN = x.shape
    H = w0.shape[1]
    OUT = w2.shape[1]
    OUT_P = max(pl.cdiv(OUT, 128) * 128, 128)   # 10 -> 128: lane-dense output stores

    if B <= 256:
        # Latency path: one full-extent block, no batch padding (block == array dims
        # satisfies the (8,128) rule for any B).
        tb = B
        B_P = B
    else:
        # Throughput path: large tiles (multiple of 256) but always >= 2 grid steps
        # so the "parallel" batch axis can use both TensorCores on v7x.
        tb = min(max_tb, pl.cdiv(pl.cdiv(B, 2), 256) * 256)
        B_P = pl.cdiv(B, tb) * tb

    xp = _pad_to(x, (B_P, IN))                      # no-op unless B_P > B
    w2p = _pad_to(w2, (H, OUT_P))                   # zero cols -> padded logits are 0
    b2p = _pad_to(b2, (1, OUT_P))

    grid = (B_P // tb,)
    resident = lambda shape: pl.BlockSpec(shape, lambda i: (0, 0))

    flops = 2 * B_P * (IN * H + H * H + H * OUT_P)
    bytes_accessed = (xp.size * 4 + w0.size * 4 + w1.size * 4 + w2p.size * 4
                      + b0.size * 4 + b1.size * 4 + b2p.size * 4
                      + B_P * OUT_P * 4)

    out_padded = pl.pallas_call(
        mlp_kernel,
        out_shape=jax.ShapeDtypeStruct((B_P, OUT_P), jnp.float32),
        grid=grid,
        in_specs=[
            pl.BlockSpec((tb, IN), lambda i: (i, 0)),   # x tile streams with the grid
            resident((IN, H)), resident((1, H)),        # fc0 weights/bias stay resident
            resident((H, H)), resident((1, H)),         # fc1
            resident((H, OUT_P)), resident((1, OUT_P)), # fc2 (output-padded)
        ],
        out_specs=pl.BlockSpec((tb, OUT_P), lambda i: (i, 0)),
        compiler_params=pltpu.CompilerParams(
            dimension_semantics=("parallel",),
            vmem_limit_bytes=32 << 20,
        ),
        cost_estimate=pl.CostEstimate(
            flops=flops, transcendentals=0, bytes_accessed=bytes_accessed),
    )(xp, w0, b0, w1, b1, w2p, b2p)

    return out_padded[:B, :OUT]


def init_linear(key, fan_in, fan_out):
    """Deterministic init mimicking PyTorch nn.Linear defaults (kaiming-uniform-ish)."""
    kw, kb = jax.random.split(key)
    bound = 1.0 / jnp.sqrt(fan_in)
    # stored as (in_features, out_features) == PyTorch weight.T
    w = jax.random.uniform(kw, (fan_in, fan_out), jnp.float32, -bound, bound)
    b = jax.random.uniform(kb, (1, fan_out), jnp.float32, -bound, bound)
    return w, b


if __name__ == "__main__":
    key = jax.random.PRNGKey(0)
    kx, k0, k1, k2 = jax.random.split(key, 4)

    batch = 2
    x = jax.random.normal(kx, (batch, 784), jnp.float32)

    w0, b0 = init_linear(k0, 784, 256)
    w1, b1 = init_linear(k1, 256, 256)
    w2, b2 = init_linear(k2, 256, 10)

    out = mlp_forward(x, w0, b0, w1, b1, w2, b2)
    out = jax.block_until_ready(out)

    # Reference: same bf16 operand rounding, f32 math (isolates kernel errors).
    bf = lambda a: a.astype(jnp.bfloat16).astype(jnp.float32)
    h1 = jnp.maximum(bf(x) @ bf(w0) + b0, 0.0)
    h2 = jnp.maximum(bf(h1) @ bf(w1) + b1, 0.0)
    ref = bf(h2) @ bf(w2) + b2

    assert out.shape == (batch, 10)
    assert jnp.allclose(out, ref, atol=2e-2, rtol=2e-2), (
        float(jnp.max(jnp.abs(out - ref))))

    print("KERNEL_OK")
</pallas_src>

<mosaic_0001>
module attributes {stable_mosaic.version = 11 : i64} {
  func.func @mlp_kernel(%arg0: i32, %arg1: memref<2x784xf32, #tpu.memory_space<vmem>>, %arg2: memref<784x256xf32, #tpu.memory_space<vmem>>, %arg3: memref<1x256xf32, #tpu.memory_space<vmem>>, %arg4: memref<256x256xf32, #tpu.memory_space<vmem>>, %arg5: memref<1x256xf32, #tpu.memory_space<vmem>>, %arg6: memref<256x128xf32, #tpu.memory_space<vmem>>, %arg7: memref<1x128xf32, #tpu.memory_space<vmem>>, %arg8: memref<2x128xf32, #tpu.memory_space<vmem>>) attributes {dimension_semantics = [#tpu.dimension_semantics<parallel>], iteration_bounds = array<i64: 1>, scalar_prefetch = 0 : i64, scratch_operands = 0 : i64, tpu.core_type = #tpu.core_type<tc>, window_params = [{transform_indices = @transform_0, window_bounds = array<i64: 2, 784>}, {pipeline_mode = #tpu.pipeline_mode<synchronous>, transform_indices = @transform_1, window_bounds = array<i64: 784, 256>}, {pipeline_mode = #tpu.pipeline_mode<synchronous>, transform_indices = @transform_2, window_bounds = array<i64: 1, 256>}, {pipeline_mode = #tpu.pipeline_mode<synchronous>, transform_indices = @transform_3, window_bounds = array<i64: 256, 256>}, {pipeline_mode = #tpu.pipeline_mode<synchronous>, transform_indices = @transform_4, window_bounds = array<i64: 1, 256>}, {pipeline_mode = #tpu.pipeline_mode<synchronous>, transform_indices = @transform_5, window_bounds = array<i64: 256, 128>}, {pipeline_mode = #tpu.pipeline_mode<synchronous>, transform_indices = @transform_6, window_bounds = array<i64: 1, 128>}, {transform_indices = @transform_7, window_bounds = array<i64: 2, 128>}]} {
    %c0 = arith.constant 0 : index
    %c0_0 = arith.constant 0 : index
    %0 = vector.load %arg1[%c0, %c0_0] : memref<2x784xf32, #tpu.memory_space<vmem>>, vector<2x784xf32>
    %1 = arith.truncf %0 : vector<2x784xf32> to vector<2x784xbf16>
    %c0_1 = arith.constant 0 : index
    %c0_2 = arith.constant 0 : index
    %2 = vector.load %arg2[%c0_1, %c0_2] : memref<784x256xf32, #tpu.memory_space<vmem>>, vector<784x256xf32>
    %3 = arith.truncf %2 : vector<784x256xf32> to vector<784x256xbf16>
    %cst = arith.constant dense<0.000000e+00> : vector<2x256xf32>
    %4 = tpu.matmul %1, %3, %cst {dimension_numbers = #tpu.dot_dimension_numbers<[1], [0], [0], [1], [0, 0, 1, 1], [], []>} : vector<2x784xbf16>, vector<784x256xbf16>, vector<2x256xf32> -> vector<2x256xf32>
    %c0_3 = arith.constant 0 : index
    %c0_4 = arith.constant 0 : index
    %5 = vector.load %arg3[%c0_3, %c0_4] : memref<1x256xf32, #tpu.memory_space<vmem>>, vector<1x256xf32>
    %6 = vector.broadcast %5 : vector<1x256xf32> to vector<2x256xf32>
    %7 = arith.addf %4, %6 : vector<2x256xf32>
    %cst_5 = arith.constant 0.000000e+00 : f32
    %8 = vector.broadcast %cst_5 : f32 to vector<2x256xf32>
    %9 = arith.maximumf %7, %8 : vector<2x256xf32>
    %10 = arith.truncf %9 : vector<2x256xf32> to vector<2x256xbf16>
    %c0_6 = arith.constant 0 : index
    %c0_7 = arith.constant 0 : index
    %11 = vector.load %arg4[%c0_6, %c0_7] : memref<256x256xf32, #tpu.memory_space<vmem>>, vector<256x256xf32>
    %12 = arith.truncf %11 : vector<256x256xf32> to vector<256x256xbf16>
    %cst_8 = arith.constant dense<0.000000e+00> : vector<2x256xf32>
    %13 = tpu.matmul %10, %12, %cst_8 {dimension_numbers = #tpu.dot_dimension_numbers<[1], [0], [0], [1], [0, 0, 1, 1], [], []>} : vector<2x256xbf16>, vector<256x256xbf16>, vector<2x256xf32> -> vector<2x256xf32>
    %c0_9 = arith.constant 0 : index
    %c0_10 = arith.constant 0 : index
    %14 = vector.load %arg5[%c0_9, %c0_10] : memref<1x256xf32, #tpu.memory_space<vmem>>, vector<1x256xf32>
    %15 = vector.broadcast %14 : vector<1x256xf32> to vector<2x256xf32>
    %16 = arith.addf %13, %15 : vector<2x256xf32>
    %cst_11 = arith.constant 0.000000e+00 : f32
    %17 = vector.broadcast %cst_11 : f32 to vector<2x256xf32>
    %18 = arith.maximumf %16, %17 : vector<2x256xf32>
    %19 = arith.truncf %18 : vector<2x256xf32> to vector<2x256xbf16>
    %c0_12 = arith.constant 0 : index
    %c0_13 = arith.constant 0 : index
    %20 = vector.load %arg6[%c0_12, %c0_13] : memref<256x128xf32, #tpu.memory_space<vmem>>, vector<256x128xf32>
    %21 = arith.truncf %20 : vector<256x128xf32> to vector<256x128xbf16>
    %cst_14 = arith.constant dense<0.000000e+00> : vector<2x128xf32>
    %22 = tpu.matmul %19, %21, %cst_14 {dimension_numbers = #tpu.dot_dimension_numbers<[1], [0], [0], [1], [0, 0, 1, 1], [], []>} : vector<2x256xbf16>, vector<256x128xbf16>, vector<2x128xf32> -> vector<2x128xf32>
    %c0_15 = arith.constant 0 : index
    %c0_16 = arith.constant 0 : index
    %23 = vector.load %arg7[%c0_15, %c0_16] : memref<1x128xf32, #tpu.memory_space<vmem>>, vector<1x128xf32>
    %24 = vector.broadcast %23 : vector<1x128xf32> to vector<2x128xf32>
    %25 = arith.addf %22, %24 : vector<2x128xf32>
    %c0_17 = arith.constant 0 : index
    %c0_18 = arith.constant 0 : index
    %26 = vector.load %arg8[%c0_17, %c0_18] : memref<2x128xf32, #tpu.memory_space<vmem>>, vector<2x128xf32>
    tpu.vector_store %arg8[%c0_17, %c0_18], %25 {strides = array<i32>} : memref<2x128xf32, #tpu.memory_space<vmem>>, vector<2x128xf32>,
    return
  }
  func.func @transform_0(%arg0: i32) -> (i32, i32) {
    %c0_i32 = arith.constant 0 : i32
    %c0_i32_0 = arith.constant 0 : i32
    return %arg0, %c0_i32 : i32, i32
  }
  func.func @transform_1(%arg0: i32) -> (i32, i32) {
    %c0_i32 = arith.constant 0 : i32
    %c0_i32_0 = arith.constant 0 : i32
    %c0_i32_1 = arith.constant 0 : i32
    return %c0_i32, %c0_i32_0 : i32, i32
  }
  func.func @transform_2(%arg0: i32) -> (i32, i32) {
    %c0_i32 = arith.constant 0 : i32
    %c0_i32_0 = arith.constant 0 : i32
    %c0_i32_1 = arith.constant 0 : i32
    return %c0_i32, %c0_i32_0 : i32, i32
  }
  func.func @transform_3(%arg0: i32) -> (i32, i32) {
    %c0_i32 = arith.constant 0 : i32
    %c0_i32_0 = arith.constant 0 : i32
    %c0_i32_1 = arith.constant 0 : i32
    return %c0_i32, %c0_i32_0 : i32, i32
  }
  func.func @transform_4(%arg0: i32) -> (i32, i32) {
    %c0_i32 = arith.constant 0 : i32
    %c0_i32_0 = arith.constant 0 : i32
    %c0_i32_1 = arith.constant 0 : i32
    return %c0_i32, %c0_i32_0 : i32, i32
  }
  func.func @transform_5(%arg0: i32) -> (i32, i32) {
    %c0_i32 = arith.constant 0 : i32
    %c0_i32_0 = arith.constant 0 : i32
    %c0_i32_1 = arith.constant 0 : i32
    return %c0_i32, %c0_i32_0 : i32, i32
  }
  func.func @transform_6(%arg0: i32) -> (i32, i32) {
    %c0_i32 = arith.constant 0 : i32
    %c0_i32_0 = arith.constant 0 : i32
    %c0_i32_1 = arith.constant 0 : i32
    return %c0_i32, %c0_i32_0 : i32, i32
  }
  func.func @transform_7(%arg0: i32) -> (i32, i32) {
    %c0_i32 = arith.constant 0 : i32
    %c0_i32_0 = arith.constant 0 : i32
    return %arg0, %c0_i32 : i32, i32
  }
}

</mosaic_0001>

<llo_original>
// kernel: tpu_custom_call.1
$region0: #{tpu_custom_call.1}
  #allocation0 [shape = 'u32[]', space=smem, size = 0x4, offset = 0x4, fixed_abs, tag = 'smem constant byte address 0x4 - core index']
  #allocation1 [shape = 'u32[144,128]{1,0:T(1,128)}', space=vmem, size = 0x12000, scoped, tag = 'internal scratch']
  %s0 = inlined_call_operand.hbm [shape: f32[2,784], index: 0, kind: input, shape index: {}]
  %s1 = inlined_call_operand.hbm [shape: f32[784,256], index: 1, kind: input, shape index: {}]
  %s2 = inlined_call_operand.vmem [shape: f32[1,256], index: 2, kind: input, shape index: {}]
  %s3 = inlined_call_operand.hbm [shape: f32[256,256], index: 3, kind: input, shape index: {}]
  %s4 = inlined_call_operand.vmem [shape: f32[1,256], index: 4, kind: input, shape index: {}]
  %s5 = inlined_call_operand.hbm [shape: f32[256,128], index: 5, kind: input, shape index: {}]
  %s6 = inlined_call_operand.vmem [shape: f32[1,128], index: 6, kind: input, shape index: {}]
  %s7 = inlined_call_operand.hbm [shape: f32[2,128], index: 7, kind: output, shape index: {}]
  %s8 = sld [smem:[#allocation0]]
  $region54: #{tpu_custom_call.1} parent=0
    _
  %s10 = ssub.s32 1, %s8
  %s11 = scalar_select 0, %s10, %s8
  $region1: #{tpu_custom_call.1} parent=0
    #allocation2 [shape = 'u8[7168]{0}', space=vmem, size = 0x1c00, scoped, tag = 'input window, operand 0, single buffered']
    #allocation3 [shape = 's32[1]{0}', space=sflag, size = 0x4, scoped, tag = 'scoped memory for tpu_custom_call.1']
    #allocation4 [shape = 's32[1]{0}', space=sflag, size = 0x4, scoped, tag = 'scoped memory for tpu_custom_call.1']
    #allocation5 [shape = 'u8[802816]{0}', space=vmem, size = 0xc4000, scoped, tag = 'input window, operand 1, single buffered']
    #allocation6 [shape = 's32[1]{0}', space=sflag, size = 0x4, scoped, tag = 'scoped memory for tpu_custom_call.1']
    #allocation7 [shape = 'u8[262144]{0}', space=vmem, size = 0x40000, scoped, tag = 'input window, operand 3, single buffered']
    #allocation8 [shape = 'u8[131072]{0}', space=vmem, size = 0x20000, scoped, tag = 'input window, operand 5, single buffered']
    #allocation9 [shape = 's32[1]{0}', space=sflag, size = 0x4, scoped, tag = 'scoped memory for tpu_custom_call.1']
    #allocation10 [shape = 'u8[1024]{0}', space=vmem, size = 0x400, scoped, tag = 'output window, operand 0, single buffered']
    %12 = vsyncpa [#allocation3], 0
    %13 = vsyncpa [#allocation6], 0
    %14 = vsyncpa [#allocation9], 0
    %15 = vsyncpa [#allocation4], 0
    // Predicated region
    $region2: #{tpu_custom_call.1} parent=1 // pred_check
      _
    $region3: #{tpu_custom_call.1} parent=1 // pred_check_branch
      %17 = sbr.rel (0) target = $region5
    $region4: #{tpu_custom_call.1} parent=1 // pred_region
      %s19 = ssub.s32 224, 224
      %20 = vsyncadd [#allocation3], %s19
      %s22 = sshll.u32 [#allocation2], 4
      %s23 = int_to_ptr.vmem [resolvable:$true] %s22
      %25 = dma.hbm_to_vmem [thread:$0]  %s0, 224, %s23, [#allocation3]
    $region5: #{tpu_custom_call.1} parent=1 // pred_fallthru
      _
    // Predicated region
    $region6: #{tpu_custom_call.1} parent=1 // pred_check
      _
    $region7: #{tpu_custom_call.1} parent=1 // pred_check_branch
      %27 = sbr.rel (0) target = $region9
    $region8: #{tpu_custom_call.1} parent=1 // pred_region
      %s29 = ssub.s32 25088, 25088
      %30 = vsyncadd [#allocation6], %s29
      %s31 = sshll.u32 [#allocation5], 4
      %s32 = int_to_ptr.vmem [resolvable:$true] %s31
      %37 = dma.hbm_to_vmem [thread:$0]  %s1, 25088, %s32, [#allocation6], 256, 256, 16
    $region9: #{tpu_custom_call.1} parent=1 // pred_fallthru
      _
    // Predicated region
    $region10: #{tpu_custom_call.1} parent=1 // pred_check
      _
    $region11: #{tpu_custom_call.1} parent=1 // pred_check_branch
      %39 = sbr.rel (0) target = $region13
    $region12: #{tpu_custom_call.1} parent=1 // pred_region
      _
    $region13: #{tpu_custom_call.1} parent=1 // pred_fallthru
      _
    // Predicated region
    $region14: #{tpu_custom_call.1} parent=1 // pred_check
      _
    $region15: #{tpu_custom_call.1} parent=1 // pred_check_branch
      %41 = sbr.rel (0) target = $region17
    $region16: #{tpu_custom_call.1} parent=1 // pred_region
      %s43 = ssub.s32 8192, 8192
      %44 = vsyncadd [#allocation6], %s43
      %s45 = sshll.u32 [#allocation7], 4
      %s46 = int_to_ptr.vmem [resolvable:$true] %s45
      %51 = dma.hbm_to_vmem [thread:$0]  %s3, 8192, %s46, [#allocation6], 256, 256, 16
    $region17: #{tpu_custom_call.1} parent=1 // pred_fallthru
      _
    // Predicated region
    $region18: #{tpu_custom_call.1} parent=1 // pred_check
      _
    $region19: #{tpu_custom_call.1} parent=1 // pred_check_branch
      %53 = sbr.rel (0) target = $region21
    $region20: #{tpu_custom_call.1} parent=1 // pred_region
      _
    $region21: #{tpu_custom_call.1} parent=1 // pred_fallthru
      _
    // Predicated region
    $region22: #{tpu_custom_call.1} parent=1 // pred_check
      _
    $region23: #{tpu_custom_call.1} parent=1 // pred_check_branch
      %55 = sbr.rel (0) target = $region25
    $region24: #{tpu_custom_call.1} parent=1 // pred_region
      %s57 = ssub.s32 4096, 4096
      %58 = vsyncadd [#allocation9], %s57
      %s59 = sshll.u32 [#allocation8], 4
      %s60 = int_to_ptr.vmem [resolvable:$true] %s59
      %65 = dma.hbm_to_vmem [thread:$0]  %s5, 4096, %s60, [#allocation9], 128, 128, 8
    $region25: #{tpu_custom_call.1} parent=1 // pred_fallthru
      _
    // Predicated region
    $region26: #{tpu_custom_call.1} parent=1 // pred_check
      _
    $region27: #{tpu_custom_call.1} parent=1 // pred_check_branch
      %67 = sbr.rel (0) target = $region29
    $region28: #{tpu_custom_call.1} parent=1 // pred_region
      _
    $region29: #{tpu_custom_call.1} parent=1 // pred_fallthru
      _
    // Predicated region
    $region30: #{tpu_custom_call.1} parent=1 // pred_check
      _
    $region31: #{tpu_custom_call.1} parent=1 // pred_check_branch
      %69 = sbr.rel (0) target = $region33
    $region32: #{tpu_custom_call.1} parent=1 // pred_region
      %70 = dma.done [#allocation3], 224
    $region33: #{tpu_custom_call.1} parent=1 // pred_fallthru
      _
    // Predicated region
    $region34: #{tpu_custom_call.1} parent=1 // pred_check
      _
    $region35: #{tpu_custom_call.1} parent=1 // pred_check_branch
      %72 = sbr.rel (0) target = $region37
    $region36: #{tpu_custom_call.1} parent=1 // pred_region
      %73 = dma.done [#allocation6], 25088
    $region37: #{tpu_custom_call.1} parent=1 // pred_fallthru
      _
    // Predicated region
    $region38: #{tpu_custom_call.1} parent=1 // pred_check
      _
    $region39: #{tpu_custom_call.1} parent=1 // pred_check_branch
      %75 = sbr.rel (0) target = $region41
    $region40: #{tpu_custom_call.1} parent=1 // pred_region
      %76 = dma.done [#allocation6], 8192
    $region41: #{tpu_custom_call.1} parent=1 // pred_fallthru
      _
    // Predicated region
    $region42: #{tpu_custom_call.1} parent=1 // pred_check
      _
    $region43: #{tpu_custom_call.1} parent=1 // pred_check_branch
      %78 = sbr.rel (0) target = $region45
    $region44: #{tpu_custom_call.1} parent=1 // pred_region
      %79 = dma.done [#allocation9], 4096
    $region45: #{tpu_custom_call.1} parent=1 // pred_fallthru
      _
    %v81 = vld [vmem:[#allocation2] sm:$0xff]
    %v82 = vld [vmem:[#allocation2 + $0x8] sm:$0x3f]
    %v85 = vcombine.high %v81, %v81
    %v87 = vunpack.c.l.s4 1983009808
    %v88 = vunpack.c.0.s8 %v87
    %v89 = vlaneseq
    %v90 = vshrl.u32 %v89, 7
    %v91 = vsub.s32 %v88, %v90
    %v92 = vrot.slane %v81, %v91
    %v94 = vunpack.c.l.s4 1983009808
    %v95 = vunpack.c.0.s8 %v94
    %v96 = vlaneseq
    %v97 = vshrl.u32 %v96, 7
    %v98 = vsub.s32 %v95, %v97
    %v99 = vrot.slane %v85, %v98
    %v100 = vcombine.high %v92, %v92
    %v101 = vcombine.high %v99, %v99
    %v102 = vcombine.high %v82, %v82
    %v104 = vunpack.c.l.s4 1983009808
    %v105 = vunpack.c.0.s8 %v104
    %v106 = vlaneseq
    %v107 = vshrl.u32 %v106, 7
    %v108 = vsub.s32 %v105, %v107
    %v109 = vrot.slane %v82, %v108
    %v111 = vunpack.c.l.s4 1983009808
    %v112 = vunpack.c.0.s8 %v111
    %v113 = vlaneseq
    %v114 = vshrl.u32 %v113, 7
    %v115 = vsub.s32 %v112, %v114
    %v116 = vrot.slane %v102, %v115
    %v117 = vcombine.high %v109, %v109
    %v125 = vpack.c.bf16 %v92, %v92
    %v126 = vpack.c.bf16 %v100, %v100
    %v127 = vpack.c.bf16 %v99, %v99
    %v128 = vpack.c.bf16 %v101, %v101
    %v129 = vpack.c.bf16 %v109, %v109
    %v130 = vpack.c.bf16 %v117, %v117
    %v131 = vpack.c.bf16 %v116, %v116
    %v132 = vld [vmem:[#allocation5] sm:$0xff]
    %v133 = vld [vmem:[#allocation5 + $0x8] sm:$0xff]
    %v134 = vld [vmem:[#allocation5 + $0x10] sm:$0xff]
    %v135 = vld [vmem:[#allocation5 + $0x18] sm:$0xff]
    %v136 = vld [vmem:[#allocation5 + $0x20] sm:$0xff]
    %v137 = vld [vmem:[#allocation5 + $0x28] sm:$0xff]
    %v138 = vld [vmem:[#allocation5 + $0x30] sm:$0xff]
    %v139 = vld [vmem:[#allocation5 + $0x38] sm:$0xff]
    %v140 = vld [vmem:[#allocation5 + $0x40] sm:$0xff]
    %v141 = vld [vmem:[#allocation5 + $0x48] sm:$0xff]
    %v142 = vld [vmem:[#allocation5 + $0x50] sm:$0xff]
    %v143 = vld [vmem:[#allocation5 + $0x58] sm:$0xff]
    %v144 = vld [vmem:[#allocation5 + $0x60] sm:$0xff]
    %v145 = vld [vmem:[#allocation5 + $0x68] sm:$0xff]
    %v146 = vld [vmem:[#allocation5 + $0x70] sm:$0xff]
    %v147 = vld [vmem:[#allocation5 + $0x78] sm:$0xff]
    %v148 = vld [vmem:[#allocation5 + $0x80] sm:$0xff]
    %v149 = vld [vmem:[#allocation5 + $0x88] sm:$0xff]
    %v150 = vld [vmem:[#allocation5 + $0x90] sm:$0xff]
    %v151 = vld [vmem:[#allocation5 + $0x98] sm:$0xff]
    %v152 = vld [vmem:[#allocation5 + $0xa0] sm:$0xff]
    %v153 = vld [vmem:[#allocation5 + $0xa8] sm:$0xff]
    %v154 = vld [vmem:[#allocation5 + $0xb0] sm:$0xff]
    %v155 = vld [vmem:[#allocation5 + $0xb8] sm:$0xff]
    %v156 = vld [vmem:[#allocation5 + $0xc0] sm:$0xff]
    %v157 = vld [vmem:[#allocation5 + $0xc8] sm:$0xff]
    %v158 = vld [vmem:[#allocation5 + $0xd0] sm:$0xff]
    %v159 = vld [vmem:[#allocation5 + $0xd8] sm:$0xff]
    %v160 = vld [vmem:[#allocation5 + $0xe0] sm:$0xff]
    %v161 = vld [vmem:[#allocation5 + $0xe8] sm:$0xff]
    %v162 = vld [vmem:[#allocation5 + $0xf0] sm:$0xff]
    %v163 = vld [vmem:[#allocation5 + $0xf8] sm:$0xff]
    %v164 = vld [vmem:[#allocation5 + $0x100] sm:$0xff]
    %v165 = vld [vmem:[#allocation5 + $0x108] sm:$0xff]
    %v166 = vld [vmem:[#allocation5 + $0x110] sm:$0xff]
    %v167 = vld [vmem:[#allocation5 + $0x118] sm:$0xff]
    %v168 = vld [vmem:[#allocation5 + $0x120] sm:$0xff]
    %v169 = vld [vmem:[#allocation5 + $0x128] sm:$0xff]
    %v170 = vld [vmem:[#allocation5 + $0x130] sm:$0xff]
    %v171 = vld [vmem:[#allocation5 + $0x138] sm:$0xff]
    %v172 = vld [vmem:[#allocation5 + $0x140] sm:$0xff]
    %v173 = vld [vmem:[#allocation5 + $0x148] sm:$0xff]
    %v174 = vld [vmem:[#allocation5 + $0x150] sm:$0xff]
    %v175 = vld [vmem:[#allocation5 + $0x158] sm:$0xff]
    %v176 = vld [vmem:[#allocation5 + $0x160] sm:$0xff]
    %v177 = vld [vmem:[#allocation5 + $0x168] sm:$0xff]
    %v178 = vld [vmem:[#allocation5 + $0x170] sm:$0xff]
    %v179 = vld [vmem:[#allocation5 + $0x178] sm:$0xff]
    %v180 = vld [vmem:[#allocation5 + $0x180] sm:$0xff]
    %v181 = vld [vmem:[#allocation5 + $0x188] sm:$0xff]
    %v182 = vld [vmem:[#allocation5 + $0x190] sm:$0xff]
    %v183 = vld [vmem:[#allocation5 + $0x198] sm:$0xff]
    %v184 = vld [vmem:[#allocation5 + $0x1a0] sm:$0xff]
    %v185 = vld [vmem:[#allocation5 + $0x1a8] sm:$0xff]
    %v186 = vld [vmem:[#allocation5 + $0x1b0] sm:$0xff]
    %v187 = vld [vmem:[#allocation5 + $0x1b8] sm:$0xff]
    %v188 = vld [vmem:[#allocation5 + $0x1c0] sm:$0xff]
    %v189 = vld [vmem:[#allocation5 + $0x1c8] sm:$0xff]
    %v190 = vld [vmem:[#allocation5 + $0x1d0] sm:$0xff]
    %v191 = vld [vmem:[#allocation5 + $0x1d8] sm:$0xff]
    %v192 = vld [vmem:[#allocation5 + $0x1e0] sm:$0xff]
    %v193 = vld [vmem:[#allocation5 + $0x1e8] sm:$0xff]
    %v194 = vld [vmem:[#allocation5 + $0x1f0] sm:$0xff]
    %v195 = vld [vmem:[#allocation5 + $0x1f8] sm:$0xff]
    %v196 = vld [vmem:[#allocation5 + $0x200] sm:$0xff]
    %v197 = vld [vmem:[#allocation5 + $0x208] sm:$0xff]
    %v198 = vld [vmem:[#allocation5 + $0x210] sm:$0xff]
    %v199 = vld [vmem:[#allocation5 + $0x218] sm:$0xff]
    %v200 = vld [vmem:[#allocation5 + $0x220] sm:$0xff]
    %v201 = vld [vmem:[#allocation5 + $0x228] sm:$0xff]
    %v202 = vld [vmem:[#allocation5 + $0x230] sm:$0xff]
    %v203 = vld [vmem:[#allocation5 + $0x238] sm:$0xff]
    %v204 = vld [vmem:[#allocation5 + $0x240] sm:$0xff]
    %v205 = vld [vmem:[#allocation5 + $0x248] sm:$0xff]
    %v206 = vld [vmem:[#allocation5 + $0x250] sm:$0xff]
    %v207 = vld [vmem:[#allocation5 + $0x258] sm:$0xff]
    %v208 = vld [vmem:[#allocation5 + $0x260] sm:$0xff]
    %v209 = vld [vmem:[#allocation5 + $0x268] sm:$0xff]
    %v210 = vld [vmem:[#allocation5 + $0x270] sm:$0xff]
    %v211 = vld [vmem:[#allocation5 + $0x278] sm:$0xff]
    %v212 = vld [vmem:[#allocation5 + $0x280] sm:$0xff]
    %v213 = vld [vmem:[#allocation5 + $0x288] sm:$0xff]
    %v214 = vld [vmem:[#allocation5 + $0x290] sm:$0xff]
    %v215 = vld [vmem:[#allocation5 + $0x298] sm:$0xff]
    %v216 = vld [vmem:[#allocation5 + $0x2a0] sm:$0xff]
    %v217 = vld [vmem:[#allocation5 + $0x2a8] sm:$0xff]
    %v218 = vld [vmem:[#allocation5 + $0x2b0] sm:$0xff]
    %v219 = vld [vmem:[#allocation5 + $0x2b8] sm:$0xff]
    %v220 = vld [vmem:[#allocation5 + $0x2c0] sm:$0xff]
    %v221 = vld [vmem:[#allocation5 + $0x2c8] sm:$0xff]
    %v222 = vld [vmem:[#allocation5 + $0x2d0] sm:$0xff]
    %v223 = vld [vmem:[#allocation5 + $0x2d8] sm:$0xff]
    %v224 = vld [vmem:[#allocation5 + $0x2e0] sm:$0xff]
    %v225 = vld [vmem:[#allocation5 + $0x2e8] sm:$0xff]
    %v226 = vld [vmem:[#allocation5 + $0x2f0] sm:$0xff]
    %v227 = vld [vmem:[#allocation5 + $0x2f8] sm:$0xff]
    %v228 = vld [vmem:[#allocation5 + $0x300] sm:$0xff]
    %v229 = vld [vmem:[#allocation5 + $0x308] sm:$0xff]
    %v230 = vld [vmem:[#allocation5 + $0x310] sm:$0xff]
    %v231 = vld [vmem:[#allocation5 + $0x318] sm:$0xff]
    %v232 = vld [vmem:[#allocation5 + $0x320] sm:$0xff]
    %v233 = vld [vmem:[#allocation5 + $0x328] sm:$0xff]
    %v234 = vld [vmem:[#allocation5 + $0x330] sm:$0xff]
    %v235 = vld [vmem:[#allocation5 + $0x338] sm:$0xff]
    %v236 = vld [vmem:[#allocation5 + $0x340] sm:$0xff]
    %v237 = vld [vmem:[#allocation5 + $0x348] sm:$0xff]
    %v238 = vld [vmem:[#allocation5 + $0x350] sm:$0xff]
    %v239 = vld [vmem:[#allocation5 + $0x358] sm:$0xff]
    %v240 = vld [vmem:[#allocation5 + $0x360] sm:$0xff]
    %v241 = vld [vmem:[#allocation5 + $0x368] sm:$0xff]
    %v242 = vld [vmem:[#allocation5 + $0x370] sm:$0xff]
    %v243 = vld [vmem:[#allocation5 + $0x378] sm:$0xff]
    %v244 = vld [vmem:[#allocation5 + $0x380] sm:$0xff]
    %v245 = vld [vmem:[#allocation5 + $0x388] sm:$0xff]
    %v246 = vld [vmem:[#allocation5 + $0x390] sm:$0xff]
    %v247 = vld [vmem:[#allocation5 + $0x398] sm:$0xff]
    %v248 = vld [vmem:[#allocation5 + $0x3a0] sm:$0xff]
    %v249 = vld [vmem:[#allocation5 + $0x3a8] sm:$0xff]
    %v250 = vld [vmem:[#allocation5 + $0x3b0] sm:$0xff]
    %v251 = vld [vmem:[#allocation5 + $0x3b8] sm:$0xff]
    %v252 = vld [vmem:[#allocation5 + $0x3c0] sm:$0xff]
    %v253 = vld [vmem:[#allocation5 + $0x3c8] sm:$0xff]
    %v254 = vld [vmem:[#allocation5 + $0x3d0] sm:$0xff]
    %v255 = vld [vmem:[#allocation5 + $0x3d8] sm:$0xff]
    %v256 = vld [vmem:[#allocation5 + $0x3e0] sm:$0xff]
    %v257 = vld [vmem:[#allocation5 + $0x3e8] sm:$0xff]
    %v258 = vld [vmem:[#allocation5 + $0x3f0] sm:$0xff]
    %v259 = vld [vmem:[#allocation5 + $0x3f8] sm:$0xff]
    %v260 = vld [vmem:[#allocation5 + $0x400] sm:$0xff]
    %v261 = vld [vmem:[#allocation5 + $0x408] sm:$0xff]
    %v262 = vld [vmem:[#allocation5 + $0x410] sm:$0xff]
    %v263 = vld [vmem:[#allocation5 + $0x418] sm:$0xff]
    %v264 = vld [vmem:[#allocation5 + $0x420] sm:$0xff]
    %v265 = vld [vmem:[#allocation5 + $0x428] sm:$0xff]
    %v266 = vld [vmem:[#allocation5 + $0x430] sm:$0xff]
    %v267 = vld [vmem:[#allocation5 + $0x438] sm:$0xff]
    %v268 = vld [vmem:[#allocation5 + $0x440] sm:$0xff]
    %v269 = vld [vmem:[#allocation5 + $0x448] sm:$0xff]
    %v270 = vld [vmem:[#allocation5 + $0x450] sm:$0xff]
    %v271 = vld [vmem:[#allocation5 + $0x458] sm:$0xff]
    %v272 = vld [vmem:[#allocation5 + $0x460] sm:$0xff]
    %v273 = vld [vmem:[#allocation5 + $0x468] sm:$0xff]
    %v274 = vld [vmem:[#allocation5 + $0x470] sm:$0xff]
    %v275 = vld [vmem:[#allocation5 + $0x478] sm:$0xff]
    %v276 = vld [vmem:[#allocation5 + $0x480] sm:$0xff]
    %v277 = vld [vmem:[#allocation5 + $0x488] sm:$0xff]
    %v278 = vld [vmem:[#allocation5 + $0x490] sm:$0xff]
    %v279 = vld [vmem:[#allocation5 + $0x498] sm:$0xff]
    %v280 = vld [vmem:[#allocation5 + $0x4a0] sm:$0xff]
    %v281 = vld [vmem:[#allocation5 + $0x4a8] sm:$0xff]
    %v282 = vld [vmem:[#allocation5 + $0x4b0] sm:$0xff]
    %v283 = vld [vmem:[#allocation5 + $0x4b8] sm:$0xff]
    %v284 = vld [vmem:[#allocation5 + $0x4c0] sm:$0xff]
    %v285 = vld [vmem:[#allocation5 + $0x4c8] sm:$0xff]
    %v286 = vld [vmem:[#allocation5 + $0x4d0] sm:$0xff]
    %v287 = vld [vmem:[#allocation5 + $0x4d8] sm:$0xff]
    %v288 = vld [vmem:[#allocation5 + $0x4e0] sm:$0xff]
    %v289 = vld [vmem:[#allocation5 + $0x4e8] sm:$0xff]
    %v290 = vld [vmem:[#allocation5 + $0x4f0] sm:$0xff]
    %v291 = vld [vmem:[#allocation5 + $0x4f8] sm:$0xff]
    %v292 = vld [vmem:[#allocation5 + $0x500] sm:$0xff]
    %v293 = vld [vmem:[#allocation5 + $0x508] sm:$0xff]
    %v294 = vld [vmem:[#allocation5 + $0x510] sm:$0xff]
    %v295 = vld [vmem:[#allocation5 + $0x518] sm:$0xff]
    %v296 = vld [vmem:[#allocation5 + $0x520] sm:$0xff]
    %v297 = vld [vmem:[#allocation5 + $0x528] sm:$0xff]
    %v298 = vld [vmem:[#allocation5 + $0x530] sm:$0xff]
    %v299 = vld [vmem:[#allocation5 + $0x538] sm:$0xff]
    %v300 = vld [vmem:[#allocation5 + $0x540] sm:$0xff]
    %v301 = vld [vmem:[#allocation5 + $0x548] sm:$0xff]
    %v302 = vld [vmem:[#allocation5 + $0x550] sm:$0xff]
    %v303 = vld [vmem:[#allocation5 + $0x558] sm:$0xff]
    %v304 = vld [vmem:[#allocation5 + $0x560] sm:$0xff]
    %v305 = vld [vmem:[#allocation5 + $0x568] sm:$0xff]
    %v306 = vld [vmem:[#allocation5 + $0x570] sm:$0xff]
    %v307 = vld [vmem:[#allocation5 + $0x578] sm:$0xff]
    %v308 = vld [vmem:[#allocation5 + $0x580] sm:$0xff]
    %v309 = vld [vmem:[#allocation5 + $0x588] sm:$0xff]
    %v310 = vld [vmem:[#allocation5 + $0x590] sm:$0xff]
    %v311 = vld [vmem:[#allocation5 + $0x598] sm:$0xff]
    %v312 = vld [vmem:[#allocation5 + $0x5a0] sm:$0xff]
    %v313 = vld [vmem:[#allocation5 + $0x5a8] sm:$0xff]
    %v314 = vld [vmem:[#allocation5 + $0x5b0] sm:$0xff]
    %v315 = vld [vmem:[#allocation5 + $0x5b8] sm:$0xff]
    %v316 = vld [vmem:[#allocation5 + $0x5c0] sm:$0xff]
    %v317 = vld [vmem:[#allocation5 + $0x5c8] sm:$0xff]
    %v318 = vld [vmem:[#allocation5 + $0x5d0] sm:$0xff]
    %v319 = vld [vmem:[#allocation5 + $0x5d8] sm:$0xff]
    %v320 = vld [vmem:[#allocation5 + $0x5e0] sm:$0xff]
    %v321 = vld [vmem:[#allocation5 + $0x5e8] sm:$0xff]
    %v322 = vld [vmem:[#allocation5 + $0x5f0] sm:$0xff]
    %v323 = vld [vmem:[#allocation5 + $0x5f8] sm:$0xff]
    %v324 = vld [vmem:[#allocation5 + $0x600] sm:$0xff]
    %v325 = vld [vmem:[#allocation5 + $0x608] sm:$0xff]
    %v326 = vld [vmem:[#allocation5 + $0x610] sm:$0xff]
    %v327 = vld [vmem:[#allocation5 + $0x618] sm:$0xff]
    %v328 = vpack.c.bf16 %v134, %v132
    %v329 = vpack.c.bf16 %v135, %v133
    %v330 = vpack.c.bf16 %v138, %v136
    %v331 = vpack.c.bf16 %v139, %v137
    %v332 = vpack.c.bf16 %v142, %v140
    %v333 = vpack.c.bf16 %v143, %v141
    %v334 = vpack.c.bf16 %v146, %v144
    %v335 = vpack.c.bf16 %v147, %v145
    %v336 = vpack.c.bf16 %v150, %v148
    %v337 = vpack.c.bf16 %v151, %v149
    %v338 = vpack.c.bf16 %v154, %v152
    %v339 = vpack.c.bf16 %v155, %v153
    %v340 = vpack.c.bf16 %v158, %v156
    %v341 = vpack.c.bf16 %v159, %v157
    %v342 = vpack.c.bf16 %v162, %v160
    %v343 = vpack.c.bf16 %v163, %v161
    %v344 = vpack.c.bf16 %v166, %v164
    %v345 = vpack.c.bf16 %v167, %v165
    %v346 = vpack.c.bf16 %v170, %v168
    %v347 = vpack.c.bf16 %v171, %v169
    %v348 = vpack.c.bf16 %v174, %v172
    %v349 = vpack.c.bf16 %v175, %v173
    %v350 = vpack.c.bf16 %v178, %v176
    %v351 = vpack.c.bf16 %v179, %v177
    %v352 = vpack.c.bf16 %v182, %v180
    %v353 = vpack.c.bf16 %v183, %v181
    %v354 = vpack.c.bf16 %v186, %v184
    %v355 = vpack.c.bf16 %v187, %v185
    %v356 = vpack.c.bf16 %v190, %v188
    %v357 = vpack.c.bf16 %v191, %v189
    %v358 = vpack.c.bf16 %v194, %v192
    %v359 = vpack.c.bf16 %v195, %v193
    %v360 = vpack.c.bf16 %v198, %v196
    %v361 = vpack.c.bf16 %v199, %v197
    %v362 = vpack.c.bf16 %v202, %v200
    %v363 = vpack.c.bf16 %v203, %v201
    %v364 = vpack.c.bf16 %v206, %v204
    %v365 = vpack.c.bf16 %v207, %v205
    %v366 = vpack.c.bf16 %v210, %v208
    %v367 = vpack.c.bf16 %v211, %v209
    %v368 = vpack.c.bf16 %v214, %v212
    %v369 = vpack.c.bf16 %v215, %v213
    %v370 = vpack.c.bf16 %v218, %v216
    %v371 = vpack.c.bf16 %v219, %v217
    %v372 = vpack.c.bf16 %v222, %v220
    %v373 = vpack.c.bf16 %v223, %v221
    %v374 = vpack.c.bf16 %v226, %v224
    %v375 = vpack.c.bf16 %v227, %v225
    %v376 = vpack.c.bf16 %v230, %v228
    %v377 = vpack.c.bf16 %v231, %v229
    %v378 = vpack.c.bf16 %v234, %v232
    %v379 = vpack.c.bf16 %v235, %v233
    %v380 = vpack.c.bf16 %v238, %v236
    %v381 = vpack.c.bf16 %v239, %v237
    %v382 = vpack.c.bf16 %v242, %v240
    %v383 = vpack.c.bf16 %v243, %v241
    %v384 = vpack.c.bf16 %v246, %v244
    %v385 = vpack.c.bf16 %v247, %v245
    %v386 = vpack.c.bf16 %v250, %v248
    %v387 = vpack.c.bf16 %v251, %v249
    %v388 = vpack.c.bf16 %v254, %v252
    %v389 = vpack.c.bf16 %v255, %v253
    %v390 = vpack.c.bf16 %v258, %v256
    %v391 = vpack.c.bf16 %v259, %v257
    %v392 = vpack.c.bf16 %v262, %v260
    %v393 = vpack.c.bf16 %v263, %v261
    %v394 = vpack.c.bf16 %v266, %v264
    %v395 = vpack.c.bf16 %v267, %v265
    %v396 = vpack.c.bf16 %v270, %v268
    %v397 = vpack.c.bf16 %v271, %v269
    %v398 = vpack.c.bf16 %v274, %v272
    %v399 = vpack.c.bf16 %v275, %v273
    %v400 = vpack.c.bf16 %v278, %v276
    %v401 = vpack.c.bf16 %v279, %v277
    %v402 = vpack.c.bf16 %v282, %v280
    %v403 = vpack.c.bf16 %v283, %v281
    %v404 = vpack.c.bf16 %v286, %v284
    %v405 = vpack.c.bf16 %v287, %v285
    %v406 = vpack.c.bf16 %v290, %v288
    %v407 = vpack.c.bf16 %v291, %v289
    %v408 = vpack.c.bf16 %v294, %v292
    %v409 = vpack.c.bf16 %v295, %v293
    %v410 = vpack.c.bf16 %v298, %v296
    %v411 = vpack.c.bf16 %v299, %v297
    %v412 = vpack.c.bf16 %v302, %v300
    %v413 = vpack.c.bf16 %v303, %v301
    %v414 = vpack.c.bf16 %v306, %v304
    %v415 = vpack.c.bf16 %v307, %v305
    %v416 = vpack.c.bf16 %v310, %v308
    %v417 = vpack.c.bf16 %v311, %v309
    %v418 = vpack.c.bf16 %v314, %v312
    %v419 = vpack.c.bf16 %v315, %v313
    %v420 = vpack.c.bf16 %v318, %v316
    %v421 = vpack.c.bf16 %v319, %v317
    %v422 = vpack.c.bf16 %v322, %v320
    %v423 = vpack.c.bf16 %v323, %v321
    %v424 = vpack.c.bf16 %v326, %v324
    %v425 = vpack.c.bf16 %v327, %v325
    %v426 = vld [vmem:[%s2] sm:$0x3]
    %v428 = vlaneseq
    %v429 = vshrl.u32 %v428, 7
    %v430 = vsub.s32 0, %v429
    %v431 = vrot.slane %v426, %v430
    %v432 = vlaneseq
    %v433 = vshrl.u32 %v432, 7
    %v434 = vsub.s32 1, %v433
    %v435 = vrot.slane %v426, %v434
    %vm438 = vcmask 130048
    %v440 = vsel %vm438, %v131, 0
    %442 = vmatprep.subr.bf16.mxu0 %v329
    %443 = vmatpush1.bf16.msra.mxu0 %v328
    %444 = vmatprep.subr.bf16.mxu0 %v331
    %445 = vmatpush1.bf16.msra.mxu0 %v330
    %446 = vmatprep.subr.bf16.mxu0 %v333
    %447 = vmatpush1.bf16.msra.mxu0 %v332
    %448 = vmatprep.subr.bf16.mxu0 %v335
    %449 = vmatpush1.bf16.msra.mxu0 %v334
    %450 = vmatprep.subr.bf16.mxu0 %v337
    %451 = vmatpush1.bf16.msra.mxu0 %v336
    %452 = vmatprep.subr.bf16.mxu0 %v339
    %453 = vmatpush1.bf16.msra.mxu0 %v338
    %454 = vmatprep.subr.bf16.mxu0 %v341
    %455 = vmatpush1.bf16.msra.mxu0 %v340
    %456 = vmatprep.subr.bf16.mxu0 %v343
    %457 = vmatpush1.bf16.msra.mxu0 %v342
    %458 = vmatprep.subr.bf16.mxu0 %v345
    %459 = vmatpush1.bf16.msra.mxu0 %v344
    %460 = vmatprep.subr.bf16.mxu0 %v347
    %461 = vmatpush1.bf16.msra.mxu0 %v346
    %462 = vmatprep.subr.bf16.mxu0 %v349
    %463 = vmatpush1.bf16.msra.mxu0 %v348
    %464 = vmatprep.subr.bf16.mxu0 %v351
    %465 = vmatpush1.bf16.msra.mxu0 %v350
    %466 = vmatprep.subr.bf16.mxu0 %v353
    %467 = vmatpush1.bf16.msra.mxu0 %v352
    %468 = vmatprep.subr.bf16.mxu0 %v355
    %469 = vmatpush1.bf16.msra.mxu0 %v354
    %470 = vmatprep.subr.bf16.mxu0 %v357
    %471 = vmatpush1.bf16.msra.mxu0 %v356
    %472 = vmatprep.subr.bf16.mxu0 %v359
    %473 = vmatpush1.bf16.msra.mxu0 %v358
    %474 = vmatprep.mubr.bf16.mxu0 %v126
    %475 = vmatmul.mubr.bf16.gmra.mrb[0].mxu0 %v125
    %v476 = vpop.f32.mrb[0].mxu0
    %v477 = vadd.f32 %v431, %v476
    %v478 = vpop.f32.mrb[0].mxu0
    %v479 = vadd.f32 %v435, %v478
    %v480 = vpop.f32.mrb[0].mxu0
    %v481 = vpop.f32.mrb[0].mxu0
    %482 = vdwg.mxu0
    %483 = vmatprep.subr.bf16.mxu0 %v361
    %484 = vmatpush1.bf16.msra.mxu0 %v360
    %485 = vmatprep.subr.bf16.mxu0 %v363
    %486 = vmatpush1.bf16.msra.mxu0 %v362
    %487 = vmatprep.subr.bf16.mxu0 %v365
    %488 = vmatpush1.bf16.msra.mxu0 %v364
    %489 = vmatprep.subr.bf16.mxu0 %v367
    %490 = vmatpush1.bf16.msra.mxu0 %v366
    %491 = vmatprep.subr.bf16.mxu0 %v369
    %492 = vmatpush1.bf16.msra.mxu0 %v368
    %493 = vmatprep.subr.bf16.mxu0 %v371
    %494 = vmatpush1.bf16.msra.mxu0 %v370
    %495 = vmatprep.subr.bf16.mxu0 %v373
    %496 = vmatpush1.bf16.msra.mxu0 %v372
    %497 = vmatprep.subr.bf16.mxu0 %v375
    %498 = vmatpush1.bf16.msra.mxu0 %v374
    %499 = vmatprep.subr.bf16.mxu0 %v377
    %500 = vmatpush1.bf16.msra.mxu0 %v376
    %501 = vmatprep.subr.bf16.mxu0 %v379
    %502 = vmatpush1.bf16.msra.mxu0 %v378
    %503 = vmatprep.subr.bf16.mxu0 %v381
    %504 = vmatpush1.bf16.msra.mxu0 %v380
    %505 = vmatprep.subr.bf16.mxu0 %v383
    %506 = vmatpush1.bf16.msra.mxu0 %v382
    %507 = vmatprep.subr.bf16.mxu0 %v385
    %508 = vmatpush1.bf16.msra.mxu0 %v384
    %509 = vmatprep.subr.bf16.mxu0 %v387
    %510 = vmatpush1.bf16.msra.mxu0 %v386
    %511 = vmatprep.subr.bf16.mxu0 %v389
    %512 = vmatpush1.bf16.msra.mxu0 %v388
    %513 = vmatprep.subr.bf16.mxu0 %v391
    %514 = vmatpush1.bf16.msra.mxu0 %v390
    %515 = vmatprep.mubr.bf16.mxu0 %v128
    %516 = vmatmul.mubr.bf16.gmra.mrb[0].mxu0 %v127
    %v517 = vpop.f32.mrb[0].mxu0
    %v518 = vadd.f32 %v477, %v517
    %v519 = vpop.f32.mrb[0].mxu0
    %v520 = vadd.f32 %v479, %v519
    %v521 = vpop.f32.mrb[0].mxu0
    %v522 = vpop.f32.mrb[0].mxu0
    %523 = vdwg.mxu0
    %524 = vmatprep.subr.bf16.mxu0 %v393
    %525 = vmatpush1.bf16.msra.mxu0 %v392
    %526 = vmatprep.subr.bf16.mxu0 %v395
    %527 = vmatpush1.bf16.msra.mxu0 %v394
    %528 = vmatprep.subr.bf16.mxu0 %v397
    %529 = vmatpush1.bf16.msra.mxu0 %v396
    %530 = vmatprep.subr.bf16.mxu0 %v399
    %531 = vmatpush1.bf16.msra.mxu0 %v398
    %532 = vmatprep.subr.bf16.mxu0 %v401
    %533 = vmatpush1.bf16.msra.mxu0 %v400
    %534 = vmatprep.subr.bf16.mxu0 %v403
    %535 = vmatpush1.bf16.msra.mxu0 %v402
    %536 = vmatprep.subr.bf16.mxu0 %v405
    %537 = vmatpush1.bf16.msra.mxu0 %v404
    %538 = vmatprep.subr.bf16.mxu0 %v407
    %539 = vmatpush1.bf16.msra.mxu0 %v406
    %540 = vmatprep.subr.bf16.mxu0 %v409
    %541 = vmatpush1.bf16.msra.mxu0 %v408
    %542 = vmatprep.subr.bf16.mxu0 %v411
    %543 = vmatpush1.bf16.msra.mxu0 %v410
    %544 = vmatprep.subr.bf16.mxu0 %v413
    %545 = vmatpush1.bf16.msra.mxu0 %v412
    %546 = vmatprep.subr.bf16.mxu0 %v415
    %547 = vmatpush1.bf16.msra.mxu0 %v414
    %548 = vmatprep.subr.bf16.mxu0 %v417
    %549 = vmatpush1.bf16.msra.mxu0 %v416
    %550 = vmatprep.subr.bf16.mxu0 %v419
    %551 = vmatpush1.bf16.msra.mxu0 %v418
    %552 = vmatprep.subr.bf16.mxu0 %v421
    %553 = vmatpush1.bf16.msra.mxu0 %v420
    %554 = vmatprep.subr.bf16.mxu0 %v423
    %555 = vmatpush1.bf16.msra.mxu0 %v422
    %556 = vmatprep.mubr.bf16.mxu0 %v130
    %557 = vmatmul.mubr.bf16.gmra.mrb[0].mxu0 %v129
    %v558 = vpop.f32.mrb[0].mxu0
    %v559 = vadd.f32 %v518, %v558
    %v560 = vpop.f32.mrb[0].mxu0
    %v561 = vadd.f32 %v520, %v560
    %v562 = vpop.f32.mrb[0].mxu0
    %v563 = vpop.f32.mrb[0].mxu0
    %564 = vdwg.mxu0
    %565 = vmatprep.subr.bf16.mxu0 %v425
    %566 = vmatpush1.bf16.msra.mxu0 %v424
    %567 = vmatprep.subr.bf16.mxu0 0
    %568 = vmatpush1.bf16.msra.mxu0 0
    %569 = vmatprep.subr.bf16.mxu0 0
    %570 = vmatpush1.bf16.msra.mxu0 0
    %571 = vmatprep.subr.bf16.mxu0 0
    %572 = vmatpush1.bf16.msra.mxu0 0
    %573 = vmatprep.subr.bf16.mxu0 0
    %574 = vmatpush1.bf16.msra.mxu0 0
    %575 = vmatprep.subr.bf16.mxu0 0
    %576 = vmatpush1.bf16.msra.mxu0 0
    %577 = vmatprep.subr.bf16.mxu0 0
    %578 = vmatpush1.bf16.msra.mxu0 0
    %579 = vmatprep.subr.bf16.mxu0 0
    %580 = vmatpush1.bf16.msra.mxu0 0
    %581 = vmatprep.subr.bf16.mxu0 0
    %582 = vmatpush1.bf16.msra.mxu0 0
    %583 = vmatprep.subr.bf16.mxu0 0
    %584 = vmatpush1.bf16.msra.mxu0 0
    %585 = vmatprep.subr.bf16.mxu0 0
    %586 = vmatpush1.bf16.msra.mxu0 0
    %587 = vmatprep.subr.bf16.mxu0 0
    %588 = vmatpush1.bf16.msra.mxu0 0
    %589 = vmatprep.subr.bf16.mxu0 0
    %590 = vmatpush1.bf16.msra.mxu0 0
    %591 = vmatprep.subr.bf16.mxu0 0
    %592 = vmatpush1.bf16.msra.mxu0 0
    %593 = vmatprep.subr.bf16.mxu0 0
    %594 = vmatpush1.bf16.msra.mxu0 0
    %595 = vmatprep.subr.bf16.mxu0 0
    %596 = vmatpush1.bf16.msra.mxu0 0
    %597 = vmatprep.mubr.bf16.mxu0 0
    %598 = vmatmul.mubr.bf16.gmra.mrb[0].mxu0 %v440
    %v599 = vpop.f32.mrb[0].mxu0
    %v600 = vadd.f32 %v559, %v599
    %v601 = vpop.f32.mrb[0].mxu0
    %v602 = vadd.f32 %v561, %v601
    %v603 = vpop.f32.mrb[0].mxu0
    %v604 = vpop.f32.mrb[0].mxu0
    %605 = vdwg.mxu0
    %v606 = vmax.f32 %v600, 0.0
    %v607 = vmax.f32 %v602, 0.0
    %v608 = vpack.c.bf16 %v606, %v606
    %v609 = vpack.c.bf16 %v607, %v607
    %v610 = vld [vmem:[#allocation7] sm:$0xff]
    %v611 = vld [vmem:[#allocation7 + $0x8] sm:$0xff]
    %v612 = vld [vmem:[#allocation7 + $0x10] sm:$0xff]
    %v613 = vld [vmem:[#allocation7 + $0x18] sm:$0xff]
    %v614 = vld [vmem:[#allocation7 + $0x20] sm:$0xff]
    %v615 = vld [vmem:[#allocation7 + $0x28] sm:$0xff]
    %v616 = vld [vmem:[#allocation7 + $0x30] sm:$0xff]
    %v617 = vld [vmem:[#allocation7 + $0x38] sm:$0xff]
    %v618 = vld [vmem:[#allocation7 + $0x40] sm:$0xff]
    %v619 = vld [vmem:[#allocation7 + $0x48] sm:$0xff]
    %v620 = vld [vmem:[#allocation7 + $0x50] sm:$0xff]
    %v621 = vld [vmem:[#allocation7 + $0x58] sm:$0xff]
    %v622 = vld [vmem:[#allocation7 + $0x60] sm:$0xff]
    %v623 = vld [vmem:[#allocation7 + $0x68] sm:$0xff]
    %v624 = vld [vmem:[#allocation7 + $0x70] sm:$0xff]
    %v625 = vld [vmem:[#allocation7 + $0x78] sm:$0xff]
    %v626 = vld [vmem:[#allocation7 + $0x80] sm:$0xff]
    %v627 = vld [vmem:[#allocation7 + $0x88] sm:$0xff]
    %v628 = vld [vmem:[#allocation7 + $0x90] sm:$0xff]
    %v629 = vld [vmem:[#allocation7 + $0x98] sm:$0xff]
    %v630 = vld [vmem:[#allocation7 + $0xa0] sm:$0xff]
    %v631 = vld [vmem:[#allocation7 + $0xa8] sm:$0xff]
    %v632 = vld [vmem:[#allocation7 + $0xb0] sm:$0xff]
    %v633 = vld [vmem:[#allocation7 + $0xb8] sm:$0xff]
    %v634 = vld [vmem:[#allocation7 + $0xc0] sm:$0xff]
    %v635 = vld [vmem:[#allocation7 + $0xc8] sm:$0xff]
    %v636 = vld [vmem:[#allocation7 + $0xd0] sm:$0xff]
    %v637 = vld [vmem:[#allocation7 + $0xd8] sm:$0xff]
    %v638 = vld [vmem:[#allocation7 + $0xe0] sm:$0xff]
    %v639 = vld [vmem:[#allocation7 + $0xe8] sm:$0xff]
    %v640 = vld [vmem:[#allocation7 + $0xf0] sm:$0xff]
    %v641 = vld [vmem:[#allocation7 + $0xf8] sm:$0xff]
    %v642 = vld [vmem:[#allocation7 + $0x100] sm:$0xff]
    %v643 = vld [vmem:[#allocation7 + $0x108] sm:$0xff]
    %v644 = vld [vmem:[#allocation7 + $0x110] sm:$0xff]
    %v645 = vld [vmem:[#allocation7 + $0x118] sm:$0xff]
    %v646 = vld [vmem:[#allocation7 + $0x120] sm:$0xff]
    %v647 = vld [vmem:[#allocation7 + $0x128] sm:$0xff]
    %v648 = vld [vmem:[#allocation7 + $0x130] sm:$0xff]
    %v649 = vld [vmem:[#allocation7 + $0x138] sm:$0xff]
    %v650 = vld [vmem:[#allocation7 + $0x140] sm:$0xff]
    %v651 = vld [vmem:[#allocation7 + $0x148] sm:$0xff]
    %v652 = vld [vmem:[#allocation7 + $0x150] sm:$0xff]
    %v653 = vld [vmem:[#allocation7 + $0x158] sm:$0xff]
    %v654 = vld [vmem:[#allocation7 + $0x160] sm:$0xff]
    %v655 = vld [vmem:[#allocation7 + $0x168] sm:$0xff]
    %v656 = vld [vmem:[#allocation7 + $0x170] sm:$0xff]
    %v657 = vld [vmem:[#allocation7 + $0x178] sm:$0xff]
    %v658 = vld [vmem:[#allocation7 + $0x180] sm:$0xff]
    %v659 = vld [vmem:[#allocation7 + $0x188] sm:$0xff]
    %v660 = vld [vmem:[#allocation7 + $0x190] sm:$0xff]
    %v661 = vld [vmem:[#allocation7 + $0x198] sm:$0xff]
    %v662 = vld [vmem:[#allocation7 + $0x1a0] sm:$0xff]
    %v663 = vld [vmem:[#allocation7 + $0x1a8] sm:$0xff]
    %v664 = vld [vmem:[#allocation7 + $0x1b0] sm:$0xff]
    %v665 = vld [vmem:[#allocation7 + $0x1b8] sm:$0xff]
    %v666 = vld [vmem:[#allocation7 + $0x1c0] sm:$0xff]
    %v667 = vld [vmem:[#allocation7 + $0x1c8] sm:$0xff]
    %v668 = vld [vmem:[#allocation7 + $0x1d0] sm:$0xff]
    %v669 = vld [vmem:[#allocation7 + $0x1d8] sm:$0xff]
    %v670 = vld [vmem:[#allocation7 + $0x1e0] sm:$0xff]
    %v671 = vld [vmem:[#allocation7 + $0x1e8] sm:$0xff]
    %v672 = vld [vmem:[#allocation7 + $0x1f0] sm:$0xff]
    %v673 = vld [vmem:[#allocation7 + $0x1f8] sm:$0xff]
    %v674 = vpack.c.bf16 %v612, %v610
    %v675 = vpack.c.bf16 %v613, %v611
    %v676 = vpack.c.bf16 %v616, %v614
    %v677 = vpack.c.bf16 %v617, %v615
    %v678 = vpack.c.bf16 %v620, %v618
    %v679 = vpack.c.bf16 %v621, %v619
    %v680 = vpack.c.bf16 %v624, %v622
    %v681 = vpack.c.bf16 %v625, %v623
    %v682 = vpack.c.bf16 %v628, %v626
    %v683 = vpack.c.bf16 %v629, %v627
    %v684 = vpack.c.bf16 %v632, %v630
    %v685 = vpack.c.bf16 %v633, %v631
    %v686 = vpack.c.bf16 %v636, %v634
    %v687 = vpack.c.bf16 %v637, %v635
    %v688 = vpack.c.bf16 %v640, %v638
    %v689 = vpack.c.bf16 %v641, %v639
    %v690 = vpack.c.bf16 %v644, %v642
    %v691 = vpack.c.bf16 %v645, %v643
    %v692 = vpack.c.bf16 %v648, %v646
    %v693 = vpack.c.bf16 %v649, %v647
    %v694 = vpack.c.bf16 %v652, %v650
    %v695 = vpack.c.bf16 %v653, %v651
    %v696 = vpack.c.bf16 %v656, %v654
    %v697 = vpack.c.bf16 %v657, %v655
    %v698 = vpack.c.bf16 %v660, %v658
    %v699 = vpack.c.bf16 %v661, %v659
    %v700 = vpack.c.bf16 %v664, %v662
    %v701 = vpack.c.bf16 %v665, %v663
    %v702 = vpack.c.bf16 %v668, %v666
    %v703 = vpack.c.bf16 %v669, %v667
    %v704 = vpack.c.bf16 %v672, %v670
    %v705 = vpack.c.bf16 %v673, %v671
    %v706 = vld [vmem:[%s4] sm:$0x3]
    %v708 = vlaneseq
    %v709 = vshrl.u32 %v708, 7
    %v710 = vsub.s32 0, %v709
    %v711 = vrot.slane %v706, %v710
    %v712 = vlaneseq
    %v713 = vshrl.u32 %v712, 7
    %v714 = vsub.s32 1, %v713
    %v715 = vrot.slane %v706, %v714
    %718 = vmatprep.subr.bf16.mxu0 %v675
    %719 = vmatpush1.bf16.msra.mxu0 %v674
    %720 = vmatprep.subr.bf16.mxu0 %v677
    %721 = vmatpush1.bf16.msra.mxu0 %v676
    %722 = vmatprep.subr.bf16.mxu0 %v679
    %723 = vmatpush1.bf16.msra.mxu0 %v678
    %724 = vmatprep.subr.bf16.mxu0 %v681
    %725 = vmatpush1.bf16.msra.mxu0 %v680
    %726 = vmatprep.subr.bf16.mxu0 %v683
    %727 = vmatpush1.bf16.msra.mxu0 %v682
    %728 = vmatprep.subr.bf16.mxu0 %v685
    %729 = vmatpush1.bf16.msra.mxu0 %v684
    %730 = vmatprep.subr.bf16.mxu0 %v687
    %731 = vmatpush1.bf16.msra.mxu0 %v686
    %732 = vmatprep.subr.bf16.mxu0 %v689
    %733 = vmatpush1.bf16.msra.mxu0 %v688
    %734 = vmatprep.subr.bf16.mxu0 %v691
    %735 = vmatpush1.bf16.msra.mxu0 %v690
    %736 = vmatprep.subr.bf16.mxu0 %v693
    %737 = vmatpush1.bf16.msra.mxu0 %v692
    %738 = vmatprep.subr.bf16.mxu0 %v695
    %739 = vmatpush1.bf16.msra.mxu0 %v694
    %740 = vmatprep.subr.bf16.mxu0 %v697
    %741 = vmatpush1.bf16.msra.mxu0 %v696
    %742 = vmatprep.subr.bf16.mxu0 %v699
    %743 = vmatpush1.bf16.msra.mxu0 %v698
    %744 = vmatprep.subr.bf16.mxu0 %v701
    %745 = vmatpush1.bf16.msra.mxu0 %v700
    %746 = vmatprep.subr.bf16.mxu0 %v703
    %747 = vmatpush1.bf16.msra.mxu0 %v702
    %748 = vmatprep.subr.bf16.mxu0 %v705
    %749 = vmatpush1.bf16.msra.mxu0 %v704
    %750 = vmatprep.mubr.bf16.mxu0 %v609
    %751 = vmatmul.mubr.bf16.gmra.mrb[0].mxu0 %v608
    %v752 = vpop.f32.mrb[0].mxu0
    %v753 = vadd.f32 %v711, %v752
    %v754 = vpop.f32.mrb[0].mxu0
    %v755 = vadd.f32 %v715, %v754
    %v756 = vpop.f32.mrb[0].mxu0
    %v757 = vpop.f32.mrb[0].mxu0
    %758 = vdwg.mxu0
    %v759 = vmax.f32 %v753, 0.0
    %v760 = vmax.f32 %v755, 0.0
    %v761 = vpack.c.bf16 %v759, %v759
    %v762 = vpack.c.bf16 %v760, %v760
    %v763 = vld [vmem:[#allocation8] sm:$0xff]
    %v764 = vld [vmem:[#allocation8 + $0x8] sm:$0xff]
    %v765 = vld [vmem:[#allocation8 + $0x10] sm:$0xff]
    %v766 = vld [vmem:[#allocation8 + $0x18] sm:$0xff]
    %v767 = vld [vmem:[#allocation8 + $0x20] sm:$0xff]
    %v768 = vld [vmem:[#allocation8 + $0x28] sm:$0xff]
    %v769 = vld [vmem:[#allocation8 + $0x30] sm:$0xff]
    %v770 = vld [vmem:[#allocation8 + $0x38] sm:$0xff]
    %v771 = vld [vmem:[#allocation8 + $0x40] sm:$0xff]
    %v772 = vld [vmem:[#allocation8 + $0x48] sm:$0xff]
    %v773 = vld [vmem:[#allocation8 + $0x50] sm:$0xff]
    %v774 = vld [vmem:[#allocation8 + $0x58] sm:$0xff]
    %v775 = vld [vmem:[#allocation8 + $0x60] sm:$0xff]
    %v776 = vld [vmem:[#allocation8 + $0x68] sm:$0xff]
    %v777 = vld [vmem:[#allocation8 + $0x70] sm:$0xff]
    %v778 = vld [vmem:[#allocation8 + $0x78] sm:$0xff]
    %v779 = vld [vmem:[#allocation8 + $0x80] sm:$0xff]
    %v780 = vld [vmem:[#allocation8 + $0x88] sm:$0xff]
    %v781 = vld [vmem:[#allocation8 + $0x90] sm:$0xff]
    %v782 = vld [vmem:[#allocation8 + $0x98] sm:$0xff]
    %v783 = vld [vmem:[#allocation8 + $0xa0] sm:$0xff]
    %v784 = vld [vmem:[#allocation8 + $0xa8] sm:$0xff]
    %v785 = vld [vmem:[#allocation8 + $0xb0] sm:$0xff]
    %v786 = vld [vmem:[#allocation8 + $0xb8] sm:$0xff]
    %v787 = vld [vmem:[#allocation8 + $0xc0] sm:$0xff]
    %v788 = vld [vmem:[#allocation8 + $0xc8] sm:$0xff]
    %v789 = vld [vmem:[#allocation8 + $0xd0] sm:$0xff]
    %v790 = vld [vmem:[#allocation8 + $0xd8] sm:$0xff]
    %v791 = vld [vmem:[#allocation8 + $0xe0] sm:$0xff]
    %v792 = vld [vmem:[#allocation8 + $0xe8] sm:$0xff]
    %v793 = vld [vmem:[#allocation8 + $0xf0] sm:$0xff]
    %v794 = vld [vmem:[#allocation8 + $0xf8] sm:$0xff]
    %v795 = vpack.c.bf16 %v764, %v763
    %v796 = vpack.c.bf16 %v766, %v765
    %v797 = vpack.c.bf16 %v768, %v767
    %v798 = vpack.c.bf16 %v770, %v769
    %v799 = vpack.c.bf16 %v772, %v771
    %v800 = vpack.c.bf16 %v774, %v773
    %v801 = vpack.c.bf16 %v776, %v775
    %v802 = vpack.c.bf16 %v778, %v777
    %v803 = vpack.c.bf16 %v780, %v779
    %v804 = vpack.c.bf16 %v782, %v781
    %v805 = vpack.c.bf16 %v784, %v783
    %v806 = vpack.c.bf16 %v786, %v785
    %v807 = vpack.c.bf16 %v788, %v787
    %v808 = vpack.c.bf16 %v790, %v789
    %v809 = vpack.c.bf16 %v792, %v791
    %v810 = vpack.c.bf16 %v794, %v793
    %v811 = vld [vmem:[%s6] sm:$0x1]
    %v813 = vlaneseq
    %v814 = vshrl.u32 %v813, 7
    %v815 = vsub.s32 0, %v814
    %v816 = vrot.slane %v811, %v815
    %818 = vmatprep.subr.bf16.mxu0 0
    %819 = vmatpush1.bf16.msra.mxu0 %v795
    %820 = vmatprep.subr.bf16.mxu0 0
    %821 = vmatpush1.bf16.msra.mxu0 %v796
    %822 = vmatprep.subr.bf16.mxu0 0
    %823 = vmatpush1.bf16.msra.mxu0 %v797
    %824 = vmatprep.subr.bf16.mxu0 0
    %825 = vmatpush1.bf16.msra.mxu0 %v798
    %826 = vmatprep.subr.bf16.mxu0 0
    %827 = vmatpush1.bf16.msra.mxu0 %v799
    %828 = vmatprep.subr.bf16.mxu0 0
    %829 = vmatpush1.bf16.msra.mxu0 %v800
    %830 = vmatprep.subr.bf16.mxu0 0
    %831 = vmatpush1.bf16.msra.mxu0 %v801
    %832 = vmatprep.subr.bf16.mxu0 0
    %833 = vmatpush1.bf16.msra.mxu0 %v802
    %834 = vmatprep.subr.bf16.mxu0 0
    %835 = vmatpush1.bf16.msra.mxu0 %v803
    %836 = vmatprep.subr.bf16.mxu0 0
    %837 = vmatpush1.bf16.msra.mxu0 %v804
    %838 = vmatprep.subr.bf16.mxu0 0
    %839 = vmatpush1.bf16.msra.mxu0 %v805
    %840 = vmatprep.subr.bf16.mxu0 0
    %841 = vmatpush1.bf16.msra.mxu0 %v806
    %842 = vmatprep.subr.bf16.mxu0 0
    %843 = vmatpush1.bf16.msra.mxu0 %v807
    %844 = vmatprep.subr.bf16.mxu0 0
    %845 = vmatpush1.bf16.msra.mxu0 %v808
    %846 = vmatprep.subr.bf16.mxu0 0
    %847 = vmatpush1.bf16.msra.mxu0 %v809
    %848 = vmatprep.subr.bf16.mxu0 0
    %849 = vmatpush1.bf16.msra.mxu0 %v810
    %850 = vmatprep.mubr.bf16.mxu0 %v762
    %851 = vmatmul.mubr.bf16.gmra.mrb[0].mxu0 %v761
    %v852 = vpop.f32.mrb[0].mxu0
    %v853 = vadd.f32 %v816, %v852
    %v854 = vpop.f32.mrb[0].mxu0
    %v855 = vpop.f32.mrb[0].mxu0
    %v856 = vpop.f32.mrb[0].mxu0
    %857 = vdwg.mxu0
    %858 = vst [vmem:[#allocation10] sm:$0x3] %v853
    // Predicated region
    $region46: #{tpu_custom_call.1} parent=1 // pred_check
      _
    $region47: #{tpu_custom_call.1} parent=1 // pred_check_branch
      %860 = sbr.rel (0) target = $region49
    $region48: #{tpu_custom_call.1} parent=1 // pred_region
      %s862 = ssub.s32 32, 32
      %863 = vsyncadd [#allocation4], %s862
      %s865 = sshll.u32 [#allocation10], 4
      %s866 = int_to_ptr.vmem [resolvable:$true] %s865
      %868 = dma.vmem_to_hbm [thread:$0]  %s866, 32, %s7, [#allocation4]
    $region49: #{tpu_custom_call.1} parent=1 // pred_fallthru
      _
    // Predicated region
    $region50: #{tpu_custom_call.1} parent=1 // pred_check
      _
    $region51: #{tpu_custom_call.1} parent=1 // pred_check_branch
      %870 = sbr.rel (0) target = $region53
    $region52: #{tpu_custom_call.1} parent=1 // pred_region
      %871 = dma.done [#allocation4], 32
    $region53: #{tpu_custom_call.1} parent=1 // pred_fallthru
      _
    %872 = vsyncpa [#allocation3], 1
    %873 = vsyncpa [#allocation6], 1
    %874 = vsyncpa [#allocation9], 1
    %875 = vsyncpa [#allocation4], 1

</llo_original>
